<compile_context>
chip_gen: v5e
topology: v5e:2x2
jax: 0.10.0
libtpu: 0.0.40
codegen_flags: <defaults>
</compile_context>

<pallas_src>
from functools import partial

import jax
import jax.numpy as jnp
from jax.experimental import pallas as pl
from jax.experimental.pallas import tpu as pltpu


def _round_up(n, m):
    return (n + m - 1) // m * m


def mlp_kernel(x_ref, w1_ref, b1_ref, w2_ref, b2_ref, o_ref):
    # x: (TB, 50) bf16   w1: (50, 32) bf16   b1: (1, 32) f32
    # w2: (8, 32) bf16   b2: (8, 1)  f32     o: (8, TB) f32  <- lane-dense
    x = x_ref[...]
    h = jnp.dot(x, w1_ref[...], preferred_element_type=jnp.float32)
    h = jnp.maximum(h + b1_ref[...], 0.0)                       # bias + ReLU (f32)
    # Second matmul with transposed RHS (same pattern as q @ k.T):
    #   y_t[o, b] = sum_k w2[o, k] * h[b, k]   -> shape (8, TB), lane-dense in b.
    y_t = jax.lax.dot_general(
        w2_ref[...], h.astype(w2_ref.dtype), (((1,), (1,)), ((), ())),
        preferred_element_type=jnp.float32,
    )
    o_ref[...] = jax.nn.sigmoid(y_t + b2_ref[...]).astype(o_ref.dtype)


def prepare_params(w1, b1, w2, b2, *, compute_dtype=jnp.bfloat16):
    """One-time parameter preprocessing (hoisted out of the per-call path).

    w1: (32, 50), b1: (32,), w2: (8, 32), b2: (8,)  -- PyTorch nn.Linear layout.
    Weights are cast to the (bf16) compute dtype once; biases stay f32 so the
    elementwise epilogue is exact.  w2 stays in (out, in) layout because the
    kernel contracts its last dim directly (transposed-RHS matmul) to emit a
    lane-dense (8, B) output.
    """
    return (
        w1.T.astype(compute_dtype),
        b1.reshape(1, -1).astype(jnp.float32),
        w2.astype(compute_dtype),
        b2.reshape(-1, 1).astype(jnp.float32),
    )


@partial(jax.jit, static_argnames=("tb", "batch_major"))
def simple_mlp_forward(x, w1_t, b1_row, w2, b2_col, *, tb=8192, batch_major=True):
    """x: (B, 50), prepared params from prepare_params().

    Returns (B, 8) f32 (batch_major=True, PyTorch semantics) or (8, B) f32
    (batch_major=False, skips the wrapper-side transpose pass).
    """
    if tb % 128 != 0:
        raise ValueError("tb must be a multiple of 128")
    B, K = x.shape              # K = 50
    H = w1_t.shape[1]           # 32
    O = w2.shape[0]             # 8

    # Stream x in the weights' compute dtype (bf16 halves the dominant HBM
    # read; under jit the convert fuses into the upstream producer).
    x = x.astype(w1_t.dtype)
    x_itemsize = jnp.dtype(x.dtype).itemsize

    # ---- Batch tile selection -------------------------------------------
    TB = min(tb, _round_up(B, 128))
    # v7x megacore: keep >=2 grid steps (when the batch allows it) so
    # dimension_semantics=("parallel",) can give each TensorCore work.
    if pl.cdiv(B, TB) < 2 and B > 2 * 128:
        TB = _round_up(pl.cdiv(B, 2), 128)
    grid = (pl.cdiv(B, TB),)    # partial last block is clipped by Pallas

    # ---- VMEM budget (lane-padded) ---------------------------------------
    # x block (TB, 50) pads to 128 lanes -> TB*128*itemsize per buffer;
    # out block (8, TB) f32; both double-buffered.  +1 MiB params/margin.
    vmem_needed = 2 * (TB * 128 * x_itemsize) + 2 * (O * TB * 4) + (1 << 20)
    if vmem_needed > 48 * (1 << 20):
        raise ValueError(
            f"tb={tb} needs ~{vmem_needed >> 20} MiB of VMEM; reduce tb "
            "(v7x has 64 MiB physical VMEM per core)."
        )
    vmem_limit = vmem_needed if vmem_needed > 12 * (1 << 20) else None

    param_bytes = sum(int(a.size) * jnp.dtype(a.dtype).itemsize
                      for a in (w1_t, b1_row, w2, b2_col))
    cost = pl.CostEstimate(
        flops=2 * B * (K * H + H * O),
        transcendentals=B * O,                       # sigmoid exp per output
        bytes_accessed=B * (K * x_itemsize + O * 4) + param_bytes,
    )

    out_t = pl.pallas_call(
        mlp_kernel,
        out_shape=jax.ShapeDtypeStruct((O, B), jnp.float32),
        grid=grid,
        in_specs=[
            pl.BlockSpec((TB, K), lambda i: (i, 0)),   # x: streamed per tile
            pl.BlockSpec((K, H), lambda i: (0, 0)),    # w1_t: VMEM-resident
            pl.BlockSpec((1, H), lambda i: (0, 0)),    # b1:   VMEM-resident
            pl.BlockSpec((O, H), lambda i: (0, 0)),    # w2:   VMEM-resident
            pl.BlockSpec((O, 1), lambda i: (0, 0)),    # b2:   VMEM-resident
        ],
        out_specs=pl.BlockSpec((O, TB), lambda i: (0, i)),  # lane-dense (8, TB)
        compiler_params=pltpu.CompilerParams(
            dimension_semantics=("parallel",),   # megacore sharding on v7x
            vmem_limit_bytes=vmem_limit,
        ),
        cost_estimate=cost,
    )(x, w1_t, b1_row, w2, b2_col)

    if batch_major:
        # Layout plumbing only (matches nn.Module's (B, 8) output); consumers
        # that can take (8, B) should pass batch_major=False to skip it.
        return out_t.T
    return out_t


def _reference(x, w1, b1, w2, b2):
    h = jnp.maximum(x @ w1.T + b1, 0.0)
    return jax.nn.sigmoid(h @ w2.T + b2)


if __name__ == "__main__":
    key = jax.random.PRNGKey(0)
    k_x, k_w1, k_b1, k_w2, k_b2 = jax.random.split(key, 5)

    # batch=200 with tb=128 -> grid of 2 steps with a clipped (72-row) last
    # tile, so the pipelined multi-tile + partial-block path is exercised even
    # at a small test size (no host-side padding anywhere).
    batch = 200
    x = jax.random.normal(k_x, (batch, 50), dtype=jnp.float32)

    # Deterministic parameter init (uniform, roughly matching nn.Linear scale).
    w1 = jax.random.uniform(k_w1, (32, 50), jnp.float32, -0.1414, 0.1414)
    b1 = jax.random.uniform(k_b1, (32,), jnp.float32, -0.1414, 0.1414)
    w2 = jax.random.uniform(k_w2, (8, 32), jnp.float32, -0.1768, 0.1768)
    b2 = jax.random.uniform(k_b2, (8,), jnp.float32, -0.1768, 0.1768)

    params = prepare_params(w1, b1, w2, b2)   # one-time preprocessing (bf16 weights)

    y = simple_mlp_forward(x, *params, tb=128)
    jax.block_until_ready(y)

    y_ref = _reference(x, w1, b1, w2, b2)
    assert y.shape == (batch, 8)
    # Tolerance deliberately relaxed to cover the bf16 input/weight stream
    # (f32 accumulation keeps the drift ~1e-3 in logits, less after sigmoid).
    assert jnp.allclose(y, y_ref, atol=2e-3, rtol=2e-3), float(
        jnp.max(jnp.abs(y - y_ref))
    )

    print("KERNEL_OK")
</pallas_src>

<mosaic_0001>
module attributes {stable_mosaic.version = 11 : i64} {
  func.func @mlp_kernel(%arg0: i32, %arg1: memref<128x50xbf16, #tpu.memory_space<vmem>>, %arg2: memref<50x32xbf16, #tpu.memory_space<vmem>>, %arg3: memref<1x32xf32, #tpu.memory_space<vmem>>, %arg4: memref<8x32xbf16, #tpu.memory_space<vmem>>, %arg5: memref<8x1xf32, #tpu.memory_space<vmem>>, %arg6: memref<8x128xf32, #tpu.memory_space<vmem>>) attributes {dimension_semantics = [#tpu.dimension_semantics<parallel>], iteration_bounds = array<i64: 2>, scalar_prefetch = 0 : i64, scratch_operands = 0 : i64, tpu.core_type = #tpu.core_type<tc>, window_params = [{transform_indices = @transform_0, window_bounds = array<i64: 128, 50>}, {pipeline_mode = #tpu.pipeline_mode<synchronous>, transform_indices = @transform_1, window_bounds = array<i64: 50, 32>}, {pipeline_mode = #tpu.pipeline_mode<synchronous>, transform_indices = @transform_2, window_bounds = array<i64: 1, 32>}, {pipeline_mode = #tpu.pipeline_mode<synchronous>, transform_indices = @transform_3, window_bounds = array<i64: 8, 32>}, {pipeline_mode = #tpu.pipeline_mode<synchronous>, transform_indices = @transform_4, window_bounds = array<i64: 8, 1>}, {transform_indices = @transform_5, window_bounds = array<i64: 8, 128>}]} {
    %c0 = arith.constant 0 : index
    %c0_0 = arith.constant 0 : index
    %0 = vector.load %arg1[%c0, %c0_0] : memref<128x50xbf16, #tpu.memory_space<vmem>>, vector<128x50xbf16>
    %c0_1 = arith.constant 0 : index
    %c0_2 = arith.constant 0 : index
    %1 = vector.load %arg2[%c0_1, %c0_2] : memref<50x32xbf16, #tpu.memory_space<vmem>>, vector<50x32xbf16>
    %cst = arith.constant dense<0.000000e+00> : vector<128x32xf32>
    %2 = tpu.matmul %0, %1, %cst {dimension_numbers = #tpu.dot_dimension_numbers<[1], [0], [0], [1], [0, 0, 1, 1], [], []>} : vector<128x50xbf16>, vector<50x32xbf16>, vector<128x32xf32> -> vector<128x32xf32>
    %c0_3 = arith.constant 0 : index
    %c0_4 = arith.constant 0 : index
    %3 = vector.load %arg3[%c0_3, %c0_4] : memref<1x32xf32, #tpu.memory_space<vmem>>, vector<1x32xf32>
    %4 = vector.broadcast %3 : vector<1x32xf32> to vector<128x32xf32>
    %5 = arith.addf %2, %4 : vector<128x32xf32>
    %cst_5 = arith.constant 0.000000e+00 : f32
    %6 = vector.broadcast %cst_5 : f32 to vector<128x32xf32>
    %7 = arith.maximumf %5, %6 : vector<128x32xf32>
    %c0_6 = arith.constant 0 : index
    %c0_7 = arith.constant 0 : index
    %8 = vector.load %arg4[%c0_6, %c0_7] : memref<8x32xbf16, #tpu.memory_space<vmem>>, vector<8x32xbf16>
    %9 = arith.truncf %7 : vector<128x32xf32> to vector<128x32xbf16>
    %cst_8 = arith.constant dense<0.000000e+00> : vector<8x128xf32>
    %10 = tpu.matmul %8, %9, %cst_8 {dimension_numbers = #tpu.dot_dimension_numbers<[1], [1], [0], [0], [0, 0, 1, 0], [], []>} : vector<8x32xbf16>, vector<128x32xbf16>, vector<8x128xf32> -> vector<8x128xf32>
    %c0_9 = arith.constant 0 : index
    %c0_10 = arith.constant 0 : index
    %11 = vector.load %arg5[%c0_9, %c0_10] : memref<8x1xf32, #tpu.memory_space<vmem>>, vector<8x1xf32>
    %12 = vector.broadcast %11 : vector<8x1xf32> to vector<8x128xf32>
    %13 = arith.addf %10, %12 : vector<8x128xf32>
    %14 = arith.negf %13 : vector<8x128xf32>
    %15 = math.exp %14 : vector<8x128xf32>
    %cst_11 = arith.constant 1.000000e+00 : f32
    %16 = vector.broadcast %cst_11 : f32 to vector<8x128xf32>
    %17 = arith.addf %16, %15 : vector<8x128xf32>
    %18 = arith.divf %16, %17 : vector<8x128xf32>
    %c0_12 = arith.constant 0 : index
    %c0_13 = arith.constant 0 : index
    %19 = vector.load %arg6[%c0_12, %c0_13] : memref<8x128xf32, #tpu.memory_space<vmem>>, vector<8x128xf32>
    tpu.vector_store %arg6[%c0_12, %c0_13], %18 {strides = array<i32>} : memref<8x128xf32, #tpu.memory_space<vmem>>, vector<8x128xf32>,
    return
  }
  func.func @transform_0(%arg0: i32) -> (i32, i32) {
    %c0_i32 = arith.constant 0 : i32
    %c0_i32_0 = arith.constant 0 : i32
    return %arg0, %c0_i32 : i32, i32
  }
  func.func @transform_1(%arg0: i32) -> (i32, i32) {
    %c0_i32 = arith.constant 0 : i32
    %c0_i32_0 = arith.constant 0 : i32
    %c0_i32_1 = arith.constant 0 : i32
    return %c0_i32, %c0_i32_0 : i32, i32
  }
  func.func @transform_2(%arg0: i32) -> (i32, i32) {
    %c0_i32 = arith.constant 0 : i32
    %c0_i32_0 = arith.constant 0 : i32
    %c0_i32_1 = arith.constant 0 : i32
    return %c0_i32, %c0_i32_0 : i32, i32
  }
  func.func @transform_3(%arg0: i32) -> (i32, i32) {
    %c0_i32 = arith.constant 0 : i32
    %c0_i32_0 = arith.constant 0 : i32
    %c0_i32_1 = arith.constant 0 : i32
    return %c0_i32, %c0_i32_0 : i32, i32
  }
  func.func @transform_4(%arg0: i32) -> (i32, i32) {
    %c0_i32 = arith.constant 0 : i32
    %c0_i32_0 = arith.constant 0 : i32
    %c0_i32_1 = arith.constant 0 : i32
    return %c0_i32, %c0_i32_0 : i32, i32
  }
  func.func @transform_5(%arg0: i32) -> (i32, i32) {
    %c0_i32 = arith.constant 0 : i32
    %c0_i32_0 = arith.constant 0 : i32
    return %c0_i32, %arg0 : i32, i32
  }
}

</mosaic_0001>

<llo_original>
// kernel: simple_mlp_forward.1
$region0: #{simple_mlp_forward.1}
  #allocation0 [shape = 'u32[]', space=smem, size = 0x4, offset = 0x4, fixed_abs, tag = 'smem constant byte address 0x4 - core index']
  #allocation1 [shape = 'u32[72,128]{1,0:T(1,128)}', space=vmem, size = 0x9000, scoped, tag = 'internal scratch']
  %s0 = inlined_call_operand.vmem [shape: bf16[200,50], index: 0, kind: input, shape index: {}]
  %s1 = inlined_call_operand.vmem [shape: bf16[50,32], index: 1, kind: input, shape index: {}]
  %s2 = inlined_call_operand.vmem [shape: f32[1,32], index: 2, kind: input, shape index: {}]
  %s3 = inlined_call_operand.vmem [shape: bf16[8,32], index: 3, kind: input, shape index: {}]
  %s4 = inlined_call_operand.vmem [shape: f32[8,1], index: 4, kind: input, shape index: {}]
  %s5 = inlined_call_operand.hbm [shape: f32[8,200], index: 5, kind: output, shape index: {}]
  %s6 = sld [smem:[#allocation0]]
  $region53: #{simple_mlp_forward.1} parent=0
    _
  %s8 = ssub.s32 1, %s6
  %s9 = scalar_select 0, %s8, %s6
  $region1: #{simple_mlp_forward.1} parent=0
    #allocation2 [shape = 'u8[8192]{0}', space=vmem, size = 0x2000, scoped, tag = 'output window, operand 0']
    #allocation3 [shape = 's32[2]{0}', space=sflag, size = 0x8, scoped, tag = 'scoped memory for simple_mlp_forward.1']
    %10 = vsyncpa [#allocation3], 0
    %s11 = scalar_lea.sflag [#allocation3], 1
    %12 = vsyncpa %s11, 0
    loop: start=0, step=1, limit=4
    $region2: #{simple_mlp_forward.1} parent=1 // loop_pre_header
      _
    $region3: #{simple_mlp_forward.1} parent=1 // loop_header
      %s14 = sphi 0, %s18
      %p15 = scmp.ge.s32.totalorder %s14, 4
      %s24 = sphi 0, %s26
      %s27 = sphi 0, %s24
      %s28 = sphi 0, %s27
      %s44 = sphi 0, %s28
      %s48 = sphi 0, %s48
      %s50 = sphi 0, %s48
      %s51 = sphi 0, %s50
      %s65 = sphi 0, %s51
      %s69 = sphi 0, %s69
      %s71 = sphi 0, %s69
      %s72 = sphi 0, %s71
      %s86 = sphi 0, %s72
      %s90 = sphi 0, %s90
      %s92 = sphi 0, %s90
      %s93 = sphi 0, %s92
      %s107 = sphi 0, %s93
      %s111 = sphi 0, %s111
      %s113 = sphi 0, %s111
      %s114 = sphi 0, %s113
      %s128 = sphi 0, %s114
      %s134 = sphi 0, %s136
      %s137 = sphi 0, %s134
      %s138 = sphi 0, %s137
      %s154 = sphi 0, %s138
    $region4: #{simple_mlp_forward.1} parent=1 // loop_header_branch
      %17 = sbr.rel (%p15) target = $region8
    $region5: #{simple_mlp_forward.1} parent=1 // loop_body
      %s19 = ssub.s32 %s14, 1
      %s20 = ssub.s32 %s14, 2
      %s21 = sadd.s32 %s14, 1
      %s22 = ssub.s32 %s14, %s21
      %p23 = scmp.eq.s32.totalorder %s22, 0
      %s25 = sadd.s32 %s24, 1
      %s26 = scalar_select %p23, %s24, %s25
      %p29 = pneg %p23
      %p30 = scmp.eq.s32.totalorder %s14, 1
      %p31 = por %p29, %p30
      %p32 = scmp.ne.s32.totalorder %s24, %s27
      %p33 = scmp.eq.s32.totalorder %s14, 0
      %p34 = por %p32, %p33
      %p35 = scmp.ne.s32.totalorder %s24, %s27
      %p36 = scmp.eq.s32.totalorder %s19, 1
      %p37 = por %p35, %p36
      %p38 = scmp.ne.s32.totalorder %s27, %s28
      %p39 = scmp.eq.s32.totalorder %s19, 0
      %p40 = por %p38, %p39
      %p41 = scmp.ne.s32.totalorder %s27, %s28
      %p42 = scmp.eq.s32.totalorder %s20, 1
      %p43 = por %p41, %p42
      %p45 = scmp.ne.s32.totalorder %s28, %s44
      %p46 = scmp.eq.s32.totalorder %s20, 0
      %p47 = por %p45, %p46
      %s49 = sadd.s32 %s48, 1
      %p52 = scmp.eq.s32.totalorder %s14, 1
      %p53 = scmp.ne.s32.totalorder %s48, %s50
      %p54 = scmp.eq.s32.totalorder %s14, 0
      %p55 = por %p53, %p54
      %p56 = scmp.ne.s32.totalorder %s48, %s50
      %p57 = scmp.eq.s32.totalorder %s19, 1
      %p58 = por %p56, %p57
      %p59 = scmp.ne.s32.totalorder %s50, %s51
      %p60 = scmp.eq.s32.totalorder %s19, 0
      %p61 = por %p59, %p60
      %p62 = scmp.ne.s32.totalorder %s50, %s51
      %p63 = scmp.eq.s32.totalorder %s20, 1
      %p64 = por %p62, %p63
      %p66 = scmp.ne.s32.totalorder %s51, %s65
      %p67 = scmp.eq.s32.totalorder %s20, 0
      %p68 = por %p66, %p67
      %s70 = sadd.s32 %s69, 1
      %p73 = scmp.eq.s32.totalorder %s14, 1
      %p74 = scmp.ne.s32.totalorder %s69, %s71
      %p75 = scmp.eq.s32.totalorder %s14, 0
      %p76 = por %p74, %p75
      %p77 = scmp.ne.s32.totalorder %s69, %s71
      %p78 = scmp.eq.s32.totalorder %s19, 1
      %p79 = por %p77, %p78
      %p80 = scmp.ne.s32.totalorder %s71, %s72
      %p81 = scmp.eq.s32.totalorder %s19, 0
      %p82 = por %p80, %p81
      %p83 = scmp.ne.s32.totalorder %s71, %s72
      %p84 = scmp.eq.s32.totalorder %s20, 1
      %p85 = por %p83, %p84
      %p87 = scmp.ne.s32.totalorder %s72, %s86
      %p88 = scmp.eq.s32.totalorder %s20, 0
      %p89 = por %p87, %p88
      %s91 = sadd.s32 %s90, 1
      %p94 = scmp.eq.s32.totalorder %s14, 1
      %p95 = scmp.ne.s32.totalorder %s90, %s92
      %p96 = scmp.eq.s32.totalorder %s14, 0
      %p97 = por %p95, %p96
      %p98 = scmp.ne.s32.totalorder %s90, %s92
      %p99 = scmp.eq.s32.totalorder %s19, 1
      %p100 = por %p98, %p99
      %p101 = scmp.ne.s32.totalorder %s92, %s93
      %p102 = scmp.eq.s32.totalorder %s19, 0
      %p103 = por %p101, %p102
      %p104 = scmp.ne.s32.totalorder %s92, %s93
      %p105 = scmp.eq.s32.totalorder %s20, 1
      %p106 = por %p104, %p105
      %p108 = scmp.ne.s32.totalorder %s93, %s107
      %p109 = scmp.eq.s32.totalorder %s20, 0
      %p110 = por %p108, %p109
      %s112 = sadd.s32 %s111, 1
      %p115 = scmp.eq.s32.totalorder %s14, 1
      %p116 = scmp.ne.s32.totalorder %s111, %s113
      %p117 = scmp.eq.s32.totalorder %s14, 0
      %p118 = por %p116, %p117
      %p119 = scmp.ne.s32.totalorder %s111, %s113
      %p120 = scmp.eq.s32.totalorder %s19, 1
      %p121 = por %p119, %p120
      %p122 = scmp.ne.s32.totalorder %s113, %s114
      %p123 = scmp.eq.s32.totalorder %s19, 0
      %p124 = por %p122, %p123
      %p125 = scmp.ne.s32.totalorder %s113, %s114
      %p126 = scmp.eq.s32.totalorder %s20, 1
      %p127 = por %p125, %p126
      %p129 = scmp.ne.s32.totalorder %s114, %s128
      %p130 = scmp.eq.s32.totalorder %s20, 0
      %p131 = por %p129, %p130
      %s132 = ssub.s32 %s14, %s21
      %p133 = scmp.eq.s32.totalorder %s132, 0
      %s135 = sadd.s32 %s134, 1
      %s136 = scalar_select %p133, %s134, %s135
      %p139 = pneg %p133
      %p140 = scmp.eq.s32.totalorder %s14, 1
      %p141 = por %p139, %p140
      %p142 = scmp.ne.s32.totalorder %s134, %s137
      %p143 = scmp.eq.s32.totalorder %s14, 0
      %p144 = por %p142, %p143
      %p145 = scmp.ne.s32.totalorder %s134, %s137
      %p146 = scmp.eq.s32.totalorder %s19, 1
      %p147 = por %p145, %p146
      %p148 = scmp.ne.s32.totalorder %s137, %s138
      %p149 = scmp.eq.s32.totalorder %s19, 0
      %p150 = por %p148, %p149
      %p151 = scmp.ne.s32.totalorder %s137, %s138
      %p152 = scmp.eq.s32.totalorder %s20, 1
      %p153 = por %p151, %p152
      %p155 = scmp.ne.s32.totalorder %s138, %s154
      %p156 = scmp.eq.s32.totalorder %s20, 0
      %p157 = por %p155, %p156
      %p158 = scmp.le.s32.totalorder 1, %s14
      %p159 = scmp.lt.s32.totalorder %s14, 3
      %p160 = pnand %p158, %p159
      %p161 = pneg %p160
      // Predicated region
      $region9: #{simple_mlp_forward.1} parent=5 // pred_check
        _
      $region10: #{simple_mlp_forward.1} parent=5 // pred_check_branch
        %163 = sbr.rel (%p160) target = $region12
      $region11: #{simple_mlp_forward.1} parent=5 // pred_region
        %s164 = ssub.s32 %s14, 1
        // Predicated region
        $region13: #{simple_mlp_forward.1} parent=11 // pred_check
          %p165 = pneg %p61
        $region14: #{simple_mlp_forward.1} parent=11 // pred_check_branch
          %167 = sbr.rel (%p165) target = $region16
        $region15: #{simple_mlp_forward.1} parent=11 // pred_region
          _
        $region16: #{simple_mlp_forward.1} parent=11 // pred_fallthru
          _
        // Predicated region
        $region17: #{simple_mlp_forward.1} parent=11 // pred_check
          %p168 = pneg %p82
        $region18: #{simple_mlp_forward.1} parent=11 // pred_check_branch
          %170 = sbr.rel (%p168) target = $region20
        $region19: #{simple_mlp_forward.1} parent=11 // pred_region
          _
        $region20: #{simple_mlp_forward.1} parent=11 // pred_fallthru
          _
        // Predicated region
        $region21: #{simple_mlp_forward.1} parent=11 // pred_check
          %p171 = pneg %p103
        $region22: #{simple_mlp_forward.1} parent=11 // pred_check_branch
          %173 = sbr.rel (%p171) target = $region24
        $region23: #{simple_mlp_forward.1} parent=11 // pred_region
          _
        $region24: #{simple_mlp_forward.1} parent=11 // pred_fallthru
          _
        // Predicated region
        $region25: #{simple_mlp_forward.1} parent=11 // pred_check
          %p174 = pneg %p124
        $region26: #{simple_mlp_forward.1} parent=11 // pred_check_branch
          %176 = sbr.rel (%p174) target = $region28
        $region27: #{simple_mlp_forward.1} parent=11 // pred_region
          _
        $region28: #{simple_mlp_forward.1} parent=11 // pred_fallthru
          _
      $region12: #{simple_mlp_forward.1} parent=5 // pred_fallthru
        _
      %p177 = scmp.lt.s32.totalorder %s14, 2
      // Predicated region
      $region29: #{simple_mlp_forward.1} parent=5 // pred_check
        %p178 = pneg %p177
      $region30: #{simple_mlp_forward.1} parent=5 // pred_check_branch
        %180 = sbr.rel (%p178) target = $region32
      $region31: #{simple_mlp_forward.1} parent=5 // pred_region
        // Predicated region
        $region33: #{simple_mlp_forward.1} parent=31 // pred_check
          %p181 = pneg %p34
        $region34: #{simple_mlp_forward.1} parent=31 // pred_check_branch
          %183 = sbr.rel (%p181) target = $region36
        $region35: #{simple_mlp_forward.1} parent=31 // pred_region
          %s184 = smul.u32 16, %s14
          %s185 = ssub.s32 25, %s184
          %p186 = scmp.lt.s32.totalorder %s185, 16
          %s187 = scalar_select %p186, %s185, 16
          %s188 = smul.u32 4, %s187
          %p189 = scmp.lt.s32.totalorder %s184, 24
          %s190 = scalar_select %p189, %s184, 24
          %s191 = smul.addr %s190, 4
          %s192 = scalar_lea.vmem %s0, %s191
          %s193 = smul.u32 16, %s14
          %s194 = ssub.s32 25, %s193
          %p195 = scmp.lt.s32.totalorder %s194, 16
          %s196 = scalar_select %p195, %s194, 16
          %s197 = smul.u32 4, %s196
        $region36: #{simple_mlp_forward.1} parent=31 // pred_fallthru
          _
      $region32: #{simple_mlp_forward.1} parent=5 // pred_fallthru
        _
      %p198 = scmp.le.s32.totalorder 1, %s14
      %p199 = scmp.lt.s32.totalorder %s14, 3
      %p200 = pnand %p198, %p199
      %p201 = pneg %p200
      // Predicated region
      $region37: #{simple_mlp_forward.1} parent=5 // pred_check
        _
      $region38: #{simple_mlp_forward.1} parent=5 // pred_check_branch
        %203 = sbr.rel (%p200) target = $region40
      $region39: #{simple_mlp_forward.1} parent=5 // pred_region
        %s204 = ssub.s32 %s14, 1
        %s205 = smul.u32 16, %s19
        %s206 = ssub.s32 25, %s205
        %p207 = scmp.lt.s32.totalorder %s206, 16
        %s208 = scalar_select %p207, %s206, 16
        %s209 = smul.u32 4, %s208
        %p210 = scmp.lt.s32.totalorder %s205, 24
        %s211 = scalar_select %p210, %s205, 24
        %s212 = smul.addr %s211, 4
        %s213 = scalar_lea.vmem %s0, %s212
        %p214 = pneg %p40
        %p215 = pneg %p37
        %p216 = pneg %p61
        %p217 = pneg %p58
        %p218 = pneg %p82
        %p219 = pneg %p79
        %p220 = pneg %p103
        %p221 = pneg %p100
        %p222 = pneg %p124
        %p223 = pneg %p121
        %p224 = pneg %p150
        %p225 = pneg %p147
        %s226 = sand.u32 %s137, 1
        %s227 = scalar_lea.sflag [#allocation3], %s226
        %s228 = sand.u32 %s137, 1
        %s229 = smul.addr %s228, 8
        %s230 = scalar_lea.vmem [#allocation2], %s229
        %s231 = smul.u32 16, %s19
        %s232 = ssub.s32 25, %s231
        %p233 = scmp.lt.s32.totalorder %s232, 16
        %s234 = scalar_select %p233, %s232, 16
        %s235 = smul.u32 4, %s234
        %p236 = scmp.lt.s32.totalorder %s231, 24
        %s237 = scalar_select %p236, %s231, 24
        %s238 = smul.addr %s237, 4
        %s239 = scalar_lea.vmem %s0, %s238
        %s240 = smul.u32 16, %s19
        %s241 = ssub.s32 25, %s240
        %p242 = scmp.lt.s32.totalorder %s241, 16
        %s243 = scalar_select %p242, %s241, 16
        %s244 = smul.u32 4, %s243
        %v246 = vld [vmem:[%s239] sm:$0xf]
        %v247 = vld [vmem:[%s239 + $0x4] sm:$0xf]
        %v248 = vld [vmem:[%s239 + $0x8] sm:$0xf]
        %v249 = vld [vmem:[%s239 + $0xc] sm:$0xf]
        %v250 = vld [vmem:[%s239 + $0x10] sm:$0xf]
        %v251 = vld [vmem:[%s239 + $0x14] sm:$0xf]
        %v252 = vld [vmem:[%s239 + $0x18] sm:$0xf]
        %v253 = vld [vmem:[%s239 + $0x1c] sm:$0xf]
        %v254 = vld [vmem:[%s239 + $0x20] sm:$0xf]
        %v255 = vld [vmem:[%s239 + $0x24] sm:$0xf]
        %v256 = vld [vmem:[%s239 + $0x28] sm:$0xf]
        %v257 = vld [vmem:[%s239 + $0x2c] sm:$0xf]
        %v258 = vld [vmem:[%s239 + $0x30] sm:$0xf]
        %v259 = vld [vmem:[%s239 + $0x34] sm:$0xf]
        %v260 = vld [vmem:[%s239 + $0x38] sm:$0xf]
        %v261 = vld [vmem:[%s239 + $0x3c] sm:$0xf]
        %v262 = vld [vmem:[%s1] sm:$0xf]
        %v263 = vld [vmem:[%s1 + $0x4] sm:$0xf]
        %v264 = vld [vmem:[%s1 + $0x8] sm:$0xf]
        %v265 = vld [vmem:[%s1 + $0xc] sm:$0xf]
        %v266 = vld [vmem:[%s1 + $0x10] sm:$0xf]
        %v267 = vld [vmem:[%s1 + $0x14] sm:$0xf]
        %v268 = vld [vmem:[%s1 + $0x18] sm:$0x1]
        %v269 = vld [vmem:[%s2] sm:$0x1]
        %v271 = vperm.slane %v269, 0
        %v289 = vunpack.c.l.b16 %v246
        %v290 = vunpack.c.l.b16 %v247
        %v291 = vunpack.c.l.b16 %v248
        %v292 = vunpack.c.l.b16 %v249
        %v293 = vunpack.c.l.b16 %v250
        %v294 = vunpack.c.l.b16 %v251
        %v295 = vunpack.c.l.b16 %v252
        %v296 = vunpack.c.l.b16 %v253
        %v297 = vunpack.c.l.b16 %v254
        %v298 = vunpack.c.l.b16 %v255
        %v299 = vunpack.c.l.b16 %v256
        %v300 = vunpack.c.l.b16 %v257
        %v301 = vunpack.c.l.b16 %v258
        %v302 = vunpack.c.l.b16 %v259
        %v303 = vunpack.c.l.b16 %v260
        %v304 = vunpack.c.l.b16 %v261
        %v305 = vpack.c.b16 %v290, %v289
        %v306 = vpack.c.b16 %v292, %v291
        %v307 = vpack.c.b16 %v294, %v293
        %v308 = vpack.c.b16 %v296, %v295
        %v309 = vpack.c.b16 %v298, %v297
        %v310 = vpack.c.b16 %v300, %v299
        %v311 = vpack.c.b16 %v302, %v301
        %v312 = vpack.c.b16 %v304, %v303
        %v320 = vunpack.c.l.b16 %v262
        %v321 = vunpack.c.l.b16 %v263
        %v322 = vunpack.c.l.b16 %v264
        %v323 = vunpack.c.l.b16 %v265
        %v324 = vunpack.c.l.b16 %v266
        %v325 = vunpack.c.l.b16 %v267
        %v326 = vunpack.c.l.b16 %v268
        %v327 = vpack.c.b16 %v321, %v320
        %v328 = vpack.c.b16 %v323, %v322
        %v329 = vpack.c.b16 %v325, %v324
        %v330 = vpack.c.b16 %v326, %v326
        %vm334 = vcmask 408576
        %v336 = vsel %vm334, %v305, 0
        %v339 = vsel %vm334, %v306, 0
        %v342 = vsel %vm334, %v307, 0
        %v345 = vsel %vm334, %v308, 0
        %v348 = vsel %vm334, %v309, 0
        %v351 = vsel %vm334, %v310, 0
        %v354 = vsel %vm334, %v311, 0
        %v357 = vsel %vm334, %v312, 0
        %vm359 = vcmask 1040384
        %v361 = vsel %vm359, %v330, 0
        %363 = vmatpush.bf16.msra.mxu0 0
        %364 = vmatpush.bf16.msra.mxu0 0
        %365 = vmatpush.bf16.msra.mxu0 0
        %366 = vmatpush.bf16.msra.mxu0 0
        %367 = vmatpush.bf16.msra.mxu0 %v361
        %368 = vmatpush.bf16.msra.mxu0 %v329
        %369 = vmatpush.bf16.msra.mxu0 %v328
        %370 = vmatpush.bf16.msra.mxu0 %v327
        %371 = vmatmul.bf16.gmra.mxu0 %v336
        %v372 = vpop.f32.mrf.mxu0
        %v373 = vadd.f32 %v271, %v372
        %v374 = vpop.f32.mrf.mxu0
        %v375 = vadd.f32 %v271, %v374
        %376 = vmatmul.bf16.gmra.mxu0 %v339
        %v377 = vpop.f32.mrf.mxu0
        %v378 = vadd.f32 %v271, %v377
        %v379 = vpop.f32.mrf.mxu0
        %v380 = vadd.f32 %v271, %v379
        %381 = vmatmul.bf16.gmra.mxu0 %v342
        %v382 = vpop.f32.mrf.mxu0
        %v383 = vadd.f32 %v271, %v382
        %v384 = vpop.f32.mrf.mxu0
        %v385 = vadd.f32 %v271, %v384
        %386 = vmatmul.bf16.gmra.mxu0 %v345
        %v387 = vpop.f32.mrf.mxu0
        %v388 = vadd.f32 %v271, %v387
        %v389 = vpop.f32.mrf.mxu0
        %v390 = vadd.f32 %v271, %v389
        %391 = vmatmul.bf16.gmra.mxu0 %v348
        %v392 = vpop.f32.mrf.mxu0
        %v393 = vadd.f32 %v271, %v392
        %v394 = vpop.f32.mrf.mxu0
        %v395 = vadd.f32 %v271, %v394
        %396 = vmatmul.bf16.gmra.mxu0 %v351
        %v397 = vpop.f32.mrf.mxu0
        %v398 = vadd.f32 %v271, %v397
        %v399 = vpop.f32.mrf.mxu0
        %v400 = vadd.f32 %v271, %v399
        %401 = vmatmul.bf16.gmra.mxu0 %v354
        %v402 = vpop.f32.mrf.mxu0
        %v403 = vadd.f32 %v271, %v402
        %v404 = vpop.f32.mrf.mxu0
        %v405 = vadd.f32 %v271, %v404
        %406 = vmatmul.bf16.gmra.mxu0 %v357
        %v407 = vpop.f32.mrf.mxu0
        %v408 = vadd.f32 %v271, %v407
        %v409 = vpop.f32.mrf.mxu0
        %v410 = vadd.f32 %v271, %v409
        %411 = vdwg.mxu0
        %v412 = vmax.f32 %v373, 0.0
        %v413 = vmax.f32 %v375, 0.0
        %v414 = vmax.f32 %v378, 0.0
        %v415 = vmax.f32 %v380, 0.0
        %v416 = vmax.f32 %v383, 0.0
        %v417 = vmax.f32 %v385, 0.0
        %v418 = vmax.f32 %v388, 0.0
        %v419 = vmax.f32 %v390, 0.0
        %v420 = vmax.f32 %v393, 0.0
        %v421 = vmax.f32 %v395, 0.0
        %v422 = vmax.f32 %v398, 0.0
        %v423 = vmax.f32 %v400, 0.0
        %v424 = vmax.f32 %v403, 0.0
        %v425 = vmax.f32 %v405, 0.0
        %v426 = vmax.f32 %v408, 0.0
        %v427 = vmax.f32 %v410, 0.0
        %v428 = vld [vmem:[%s3] sm:$0xf]
        %v429 = vpack.c.bf16 %v413, %v412
        %v430 = vpack.c.bf16 %v415, %v414
        %v431 = vpack.c.bf16 %v417, %v416
        %v432 = vpack.c.bf16 %v419, %v418
        %v433 = vpack.c.bf16 %v421, %v420
        %v434 = vpack.c.bf16 %v423, %v422
        %v435 = vpack.c.bf16 %v425, %v424
        %v436 = vpack.c.bf16 %v427, %v426
        %v437 = vld [vmem:[%s4] sm:$0xff]
        %439 = vset.pattern.permute.xlu0 0
        %440 = vperm.xlu0 %439, %v437
        %v441 = vpop.permute.xlu0 %440
        %vm443 = vcmask 261120
        %v445 = vsel %vm443, %v428, 0
        %v448 = vsel %vm443, %v429, 0
        %v451 = vsel %vm443, %v430, 0
        %v454 = vsel %vm443, %v431, 0
        %v457 = vsel %vm443, %v432, 0
        %v460 = vsel %vm443, %v433, 0
        %v463 = vsel %vm443, %v434, 0
        %v466 = vsel %vm443, %v435, 0
        %v469 = vsel %vm443, %v436, 0
        %471 = vmatpush.bf16.xpose.msra.mxu0 %v469
        %472 = vmatpush.bf16.xpose.msra.mxu0 %v466
        %473 = vmatpush.bf16.xpose.msra.mxu0 %v463
        %474 = vmatpush.bf16.xpose.msra.mxu0 %v460
        %475 = vmatpush.bf16.xpose.msra.mxu0 %v457
        %476 = vmatpush.bf16.xpose.msra.mxu0 %v454
        %477 = vmatpush.bf16.xpose.msra.mxu0 %v451
        %478 = vmatpush.bf16.xpose.msra.mxu0 %v448
        %479 = vmatmul.bf16.gmra.mxu0 %v445
        %v480 = vpop.f32.mrf.mxu0
        %v481 = vadd.f32 %v441, %v480
        %v482 = vpop.f32.mrf.mxu0
        %483 = vdwg.mxu0
        %v484 = vxor.u32 %v481, 2147483648
        %v485 = vmul.f32 %v484, 1.442695
        %v486 = vpow.pop %v485
        %v487 = vadd.f32 %v486, 1.0
        %v488 = vrcp.pop %v487
        %v489 = vmul.f32 %v487, %v488
        %v490 = vsub.f32 1.0, %v489
        %v491 = vmul.f32 %v488, %v490
        %v492 = vadd.f32 %v488, %v491
        %vm493 = vweird.f32 %v487
        %vm494 = vweird.f32 %v488
        %vm495 = vmor %vm493, %vm494
        %v496 = vsel %vm495, %v488, %v492
        %v497 = vand.u32 2147483647, %v487
        %vm498 = vcmp.eq.f32.partialorder %v497, 8.507059e+37
        %v499 = vand.u32 %v487, 2147483648
        %v500 = vor.u32 1.1754944e-38, %v499
        %v501 = vsel %vm498, %v500, %v496
        %v502 = vmul.f32 1.0, %v501
        %503 = vst [vmem:[%s230] sm:$0xff] %v502
        %s504 = sand.u32 %s137, 1
        %s505 = scalar_lea.sflag [#allocation3], %s504
        %s506 = sand.u32 %s137, 1
        %s507 = smul.addr %s506, 8
        %s508 = scalar_lea.vmem [#allocation2], %s507
        // Predicated region
        $region41: #{simple_mlp_forward.1} parent=39 // pred_check
          %p509 = pneg %p147
        $region42: #{simple_mlp_forward.1} parent=39 // pred_check_branch
          %511 = sbr.rel (%p509) target = $region44
        $region43: #{simple_mlp_forward.1} parent=39 // pred_region
          %513 = vsyncadd %s505, 0
          %s514 = smul.addr %s19, 8
          %s515 = scalar_lea.hbm %s5, %s514
          %s517 = sshll.u32 %s508, 4
          %s518 = int_to_ptr.vmem [resolvable:$true] %s517
          %s519 = sshll.u32 %s515, 4
          %s520 = int_to_ptr.hbm [resolvable:$true] %s519
          %522 = dma.vmem_to_hbm [thread:$0]  %s518, 128, %s520, %s505
        $region44: #{simple_mlp_forward.1} parent=39 // pred_fallthru
          _
      $region40: #{simple_mlp_forward.1} parent=5 // pred_fallthru
        _
      %p523 = scmp.le.s32.totalorder 2, %s14
      // Predicated region
      $region45: #{simple_mlp_forward.1} parent=5 // pred_check
        %p524 = pneg %p523
      $region46: #{simple_mlp_forward.1} parent=5 // pred_check_branch
        %526 = sbr.rel (%p524) target = $region48
      $region47: #{simple_mlp_forward.1} parent=5 // pred_region
        %s527 = ssub.s32 %s14, 2
        // Predicated region
        $region49: #{simple_mlp_forward.1} parent=47 // pred_check
          %p528 = pneg %p153
        $region50: #{simple_mlp_forward.1} parent=47 // pred_check_branch
          %530 = sbr.rel (%p528) target = $region52
        $region51: #{simple_mlp_forward.1} parent=47 // pred_region
          %s531 = sand.u32 %s138, 1
          %s532 = scalar_lea.sflag [#allocation3], %s531
          %s533 = sand.u32 %s138, 1
          %s534 = smul.addr %s533, 8
          %s535 = scalar_lea.vmem [#allocation2], %s534
          %537 = dma.done %s532, 128
        $region52: #{simple_mlp_forward.1} parent=47 // pred_fallthru
          _
      $region48: #{simple_mlp_forward.1} parent=5 // pred_fallthru
        _
    $region6: #{simple_mlp_forward.1} parent=1 // loop_footer
      %s18 = sadd.s32 1, %s14
    $region7: #{simple_mlp_forward.1} parent=1 // loop_footer_branch
      %13 = sbr.rel target = $region3
    $region8: #{simple_mlp_forward.1} parent=1 // loop_exit
      _
    %538 = vsyncpa [#allocation3], 1
    %s539 = scalar_lea.sflag [#allocation3], 1
    %540 = vsyncpa %s539, 1

</llo_original>
